<compile_context>
chip_gen: v6e
topology: v6e:2x2x1
jax: 0.10.0
libtpu: 0.0.40
codegen_flags: <defaults>
</compile_context>

<pallas_src>
import functools

import jax
import jax.numpy as jnp
from jax import lax
from jax.experimental import pallas as pl
from jax.experimental.pallas import tpu as pltpu


def _fused_mlp_kernel(x_ref, *refs, n_layers: int):
    """Whole MLP on one batch tile, batch on the lane axis throughout."""
    o_ref = refs[-1]
    wb = refs[:-1]  # (w0, b0, w1, b1, ..., w_{L-1}, b_{L-1}), PyTorch-oriented.

    # Layer 0: contract feature dims of W (out0, in) and x tile (TB, in).
    # Result is (out0, TB): batch lands on lanes with no explicit transpose op.
    w0 = wb[0][...]
    b0 = wb[1][...]
    h = lax.dot_general(
        w0, x_ref[...],
        dimension_numbers=(((1,), (1,)), ((), ())),
        preferred_element_type=jnp.float32,
    ) + b0
    if n_layers > 1:
        h = jnp.maximum(h, 0.0)

    # Remaining layers: plain (out_i, in_i) @ (in_i, TB) matmuls, all lane-dense.
    for i in range(1, n_layers):
        w = wb[2 * i][...]
        b = wb[2 * i + 1][...]
        h = jnp.dot(w, h, preferred_element_type=jnp.float32) + b
        if i < n_layers - 1:
            h = jnp.maximum(h, 0.0)

    o_ref[...] = h.astype(o_ref.dtype)  # (1, TB) lane-dense store.


def _round_up(a: int, m: int) -> int:
    return ((a + m - 1) // m) * m


def _choose_batch_tile(B: int, block_batch: int) -> int:
    """Lane-mapped batch tile.

    * B <= 128: single block equal to the full batch dim (legal: block == array dim).
    * B  > 128: tile is a multiple of 128 (lane width), at most `block_batch`, and
      at most ceil(B/2) so the grid has >= 2 steps (lets the "parallel" axis use
      both TensorCores on v7x).  The last block may be partial (OOB-masked).
    """
    if B <= 128:
        return B
    cap = max(128, (block_batch // 128) * 128)
    two_way = _round_up(-(-B // 2), 128)
    return min(cap, two_way)


def pknn_forward(x, params, *, block_batch: int = 8192):
    """Fused forward pass: one pallas_call for the whole network.

    x: (B, in_features) float32, params: list of (w (out, in), b (out, 1)).
    Returns (B, 1), matching the PyTorch module.
    """
    B, in_features = x.shape
    n_layers = len(params)
    out_dim = params[-1][0].shape[0]  # == 1

    TB = _choose_batch_tile(B, block_batch)
    grid = -(-B // TB)  # cdiv; last block (if partial) is handled by Pallas masking.

    flat_params = []
    in_specs = [pl.BlockSpec((TB, in_features), lambda i: (i, 0))]
    for (w, b) in params:
        flat_params.append(w)
        flat_params.append(b)
        # Constant index_map => weights/biases stay VMEM-resident across the grid.
        in_specs.append(pl.BlockSpec(w.shape, lambda i: (0, 0)))
        in_specs.append(pl.BlockSpec(b.shape, lambda i: (0, 0)))

    # Advisory cost estimate for the XLA scheduler.
    flops = 2 * B * sum(int(w.shape[0]) * int(w.shape[1]) for w, _ in params)
    bytes_accessed = (
        B * in_features * x.dtype.itemsize
        + B * out_dim * x.dtype.itemsize
        + sum(w.size * 4 + b.size * 4 for w, b in params)
    )
    cost = pl.CostEstimate(flops=flops, transcendentals=0,
                           bytes_accessed=bytes_accessed)

    kernel = functools.partial(_fused_mlp_kernel, n_layers=n_layers)

    out = pl.pallas_call(
        kernel,
        out_shape=jax.ShapeDtypeStruct((out_dim, B), x.dtype),  # lane-dense (1, B)
        grid=(grid,),
        in_specs=in_specs,
        out_specs=pl.BlockSpec((out_dim, TB), lambda i: (0, i)),
        compiler_params=pltpu.CompilerParams(
            dimension_semantics=("parallel",),
        ),
        cost_estimate=cost,
    )(x, *flat_params)

    # (1, B) -> (B, 1): pure reshape (same memory order), matches torch output shape.
    return out.reshape(B, out_dim)


def init_pknn_params(key, layer_sizes):
    """Deterministic init mimicking torch.nn.Linear default (uniform +/- 1/sqrt(fan_in)).

    Weights are stored PyTorch-style as (out_features, in_features); biases as
    (out_features, 1).
    """
    dims = list(layer_sizes) + [1]
    params = []
    for i in range(len(dims) - 1):
        fan_in, fan_out = dims[i], dims[i + 1]
        key, wk, bk = jax.random.split(key, 3)
        bound = 1.0 / float(fan_in) ** 0.5
        w = jax.random.uniform(wk, (fan_out, fan_in), jnp.float32, -bound, bound)
        b = jax.random.uniform(bk, (fan_out, 1), jnp.float32, -bound, bound)
        params.append((w, b))
    return params


def pknn_ref(x, params):
    """Plain-JAX reference (identical math to the PyTorch module)."""
    h = x
    n_layers = len(params)
    for i, (w, b) in enumerate(params):
        h = h @ w.T + b[:, 0]
        if i < n_layers - 1:
            h = jnp.maximum(h, 0.0)
    return h


if __name__ == "__main__":
    key = jax.random.PRNGKey(0)
    layer_sizes = [4, 32, 16]          # pknn(layer_sizes=[4, 32, 16])
    batch = 8

    key, xk, pk = jax.random.split(key, 3)
    x = jax.random.normal(xk, (batch, layer_sizes[0]), jnp.float32)
    params = init_pknn_params(pk, layer_sizes)

    # Small-batch path: single full-batch block, grid == 1.
    out = jax.block_until_ready(pknn_forward(x, params))
    ref = pknn_ref(x, params).reshape(batch, 1)
    assert out.shape == (batch, 1), out.shape
    assert jnp.allclose(out, ref, atol=1e-5, rtol=1e-5), (out, ref)

    # Multi-tile path: grid > 1, partial last block (masked OOB), resident weights,
    # no wrapper-side padding.
    key, xk2 = jax.random.split(key)
    x2 = jax.random.normal(xk2, (300, layer_sizes[0]), jnp.float32)
    out2 = jax.block_until_ready(pknn_forward(x2, params))
    ref2 = pknn_ref(x2, params).reshape(300, 1)
    assert out2.shape == (300, 1), out2.shape
    assert jnp.allclose(out2, ref2, atol=1e-5, rtol=1e-5)

    print("KERNEL_OK")
</pallas_src>

<mosaic_0001>
module attributes {stable_mosaic.version = 11 : i64} {
  func.func @_fused_mlp_kernel(%arg0: i32, %arg1: memref<8x4xf32, #tpu.memory_space<vmem>>, %arg2: memref<32x4xf32, #tpu.memory_space<vmem>>, %arg3: memref<32x1xf32, #tpu.memory_space<vmem>>, %arg4: memref<16x32xf32, #tpu.memory_space<vmem>>, %arg5: memref<16x1xf32, #tpu.memory_space<vmem>>, %arg6: memref<1x16xf32, #tpu.memory_space<vmem>>, %arg7: memref<1x1xf32, #tpu.memory_space<vmem>>, %arg8: memref<1x8xf32, #tpu.memory_space<vmem>>) attributes {dimension_semantics = [#tpu.dimension_semantics<parallel>], iteration_bounds = array<i64: 1>, scalar_prefetch = 0 : i64, scratch_operands = 0 : i64, tpu.core_type = #tpu.core_type<tc>, window_params = [{transform_indices = @transform_0, window_bounds = array<i64: 8, 4>}, {pipeline_mode = #tpu.pipeline_mode<synchronous>, transform_indices = @transform_1, window_bounds = array<i64: 32, 4>}, {pipeline_mode = #tpu.pipeline_mode<synchronous>, transform_indices = @transform_2, window_bounds = array<i64: 32, 1>}, {pipeline_mode = #tpu.pipeline_mode<synchronous>, transform_indices = @transform_3, window_bounds = array<i64: 16, 32>}, {pipeline_mode = #tpu.pipeline_mode<synchronous>, transform_indices = @transform_4, window_bounds = array<i64: 16, 1>}, {pipeline_mode = #tpu.pipeline_mode<synchronous>, transform_indices = @transform_5, window_bounds = array<i64: 1, 16>}, {pipeline_mode = #tpu.pipeline_mode<synchronous>, transform_indices = @transform_6, window_bounds = array<i64: 1, 1>}, {transform_indices = @transform_7, window_bounds = array<i64: 1, 8>}]} {
    %c0 = arith.constant 0 : index
    %c0_0 = arith.constant 0 : index
    %0 = vector.load %arg2[%c0, %c0_0] : memref<32x4xf32, #tpu.memory_space<vmem>>, vector<32x4xf32>
    %c0_1 = arith.constant 0 : index
    %c0_2 = arith.constant 0 : index
    %1 = vector.load %arg3[%c0_1, %c0_2] : memref<32x1xf32, #tpu.memory_space<vmem>>, vector<32x1xf32>
    %c0_3 = arith.constant 0 : index
    %c0_4 = arith.constant 0 : index
    %2 = vector.load %arg1[%c0_3, %c0_4] : memref<8x4xf32, #tpu.memory_space<vmem>>, vector<8x4xf32>
    %cst = arith.constant dense<0.000000e+00> : vector<32x8xf32>
    %3 = tpu.matmul %0, %2, %cst {dimension_numbers = #tpu.dot_dimension_numbers<[1], [1], [0], [0], [0, 0, 1, 0], [], []>} : vector<32x4xf32>, vector<8x4xf32>, vector<32x8xf32> -> vector<32x8xf32>
    %4 = vector.broadcast %1 : vector<32x1xf32> to vector<32x8xf32>
    %5 = arith.addf %3, %4 : vector<32x8xf32>
    %cst_5 = arith.constant 0.000000e+00 : f32
    %6 = vector.broadcast %cst_5 : f32 to vector<32x8xf32>
    %7 = arith.maximumf %5, %6 : vector<32x8xf32>
    %c0_6 = arith.constant 0 : index
    %c0_7 = arith.constant 0 : index
    %8 = vector.load %arg4[%c0_6, %c0_7] : memref<16x32xf32, #tpu.memory_space<vmem>>, vector<16x32xf32>
    %c0_8 = arith.constant 0 : index
    %c0_9 = arith.constant 0 : index
    %9 = vector.load %arg5[%c0_8, %c0_9] : memref<16x1xf32, #tpu.memory_space<vmem>>, vector<16x1xf32>
    %cst_10 = arith.constant dense<0.000000e+00> : vector<16x8xf32>
    %10 = tpu.matmul %8, %7, %cst_10 {dimension_numbers = #tpu.dot_dimension_numbers<[1], [0], [0], [1], [0, 0, 1, 1], [], []>} : vector<16x32xf32>, vector<32x8xf32>, vector<16x8xf32> -> vector<16x8xf32>
    %11 = vector.broadcast %9 : vector<16x1xf32> to vector<16x8xf32>
    %12 = arith.addf %10, %11 : vector<16x8xf32>
    %cst_11 = arith.constant 0.000000e+00 : f32
    %13 = vector.broadcast %cst_11 : f32 to vector<16x8xf32>
    %14 = arith.maximumf %12, %13 : vector<16x8xf32>
    %c0_12 = arith.constant 0 : index
    %c0_13 = arith.constant 0 : index
    %15 = vector.load %arg6[%c0_12, %c0_13] : memref<1x16xf32, #tpu.memory_space<vmem>>, vector<1x16xf32>
    %c0_14 = arith.constant 0 : index
    %c0_15 = arith.constant 0 : index
    %16 = vector.load %arg7[%c0_14, %c0_15] : memref<1x1xf32, #tpu.memory_space<vmem>>, vector<1x1xf32>
    %cst_16 = arith.constant dense<0.000000e+00> : vector<1x8xf32>
    %17 = tpu.matmul %15, %14, %cst_16 {dimension_numbers = #tpu.dot_dimension_numbers<[1], [0], [0], [1], [0, 0, 1, 1], [], []>} : vector<1x16xf32>, vector<16x8xf32>, vector<1x8xf32> -> vector<1x8xf32>
    %18 = vector.broadcast %16 : vector<1x1xf32> to vector<1x8xf32>
    %19 = arith.addf %17, %18 : vector<1x8xf32>
    %c0_17 = arith.constant 0 : index
    %c0_18 = arith.constant 0 : index
    %20 = vector.load %arg8[%c0_17, %c0_18] : memref<1x8xf32, #tpu.memory_space<vmem>>, vector<1x8xf32>
    tpu.vector_store %arg8[%c0_17, %c0_18], %19 {strides = array<i32>} : memref<1x8xf32, #tpu.memory_space<vmem>>, vector<1x8xf32>,
    return
  }
  func.func @transform_0(%arg0: i32) -> (i32, i32) {
    %c0_i32 = arith.constant 0 : i32
    %c0_i32_0 = arith.constant 0 : i32
    return %arg0, %c0_i32 : i32, i32
  }
  func.func @transform_1(%arg0: i32) -> (i32, i32) {
    %c0_i32 = arith.constant 0 : i32
    %c0_i32_0 = arith.constant 0 : i32
    %c0_i32_1 = arith.constant 0 : i32
    return %c0_i32, %c0_i32_0 : i32, i32
  }
  func.func @transform_2(%arg0: i32) -> (i32, i32) {
    %c0_i32 = arith.constant 0 : i32
    %c0_i32_0 = arith.constant 0 : i32
    %c0_i32_1 = arith.constant 0 : i32
    return %c0_i32, %c0_i32_0 : i32, i32
  }
  func.func @transform_3(%arg0: i32) -> (i32, i32) {
    %c0_i32 = arith.constant 0 : i32
    %c0_i32_0 = arith.constant 0 : i32
    %c0_i32_1 = arith.constant 0 : i32
    return %c0_i32, %c0_i32_0 : i32, i32
  }
  func.func @transform_4(%arg0: i32) -> (i32, i32) {
    %c0_i32 = arith.constant 0 : i32
    %c0_i32_0 = arith.constant 0 : i32
    %c0_i32_1 = arith.constant 0 : i32
    return %c0_i32, %c0_i32_0 : i32, i32
  }
  func.func @transform_5(%arg0: i32) -> (i32, i32) {
    %c0_i32 = arith.constant 0 : i32
    %c0_i32_0 = arith.constant 0 : i32
    %c0_i32_1 = arith.constant 0 : i32
    return %c0_i32, %c0_i32_0 : i32, i32
  }
  func.func @transform_6(%arg0: i32) -> (i32, i32) {
    %c0_i32 = arith.constant 0 : i32
    %c0_i32_0 = arith.constant 0 : i32
    %c0_i32_1 = arith.constant 0 : i32
    return %c0_i32, %c0_i32_0 : i32, i32
  }
  func.func @transform_7(%arg0: i32) -> (i32, i32) {
    %c0_i32 = arith.constant 0 : i32
    %c0_i32_0 = arith.constant 0 : i32
    return %c0_i32, %arg0 : i32, i32
  }
}

</mosaic_0001>

<llo_original>
// kernel: tpu_custom_call.1
$region0: #{tpu_custom_call.1}
  #allocation0 [shape = 'u32[]', space=smem, size = 0x4, offset = 0x4, fixed_abs, tag = 'smem constant byte address 0x4 - core index']
  #allocation1 [shape = 'u32[144,128]{1,0:T(1,128)}', space=vmem, size = 0x12000, scoped, tag = 'internal scratch']
  #allocation2 [shape = 'f32[1,1]{1,0:T(1,128)S(1)}', space=vmem, size = 0x200, scoped, tag = 'scoped memory for tpu_custom_call.1']
  %s0 = inlined_call_operand.vmem [shape: f32[8,4], index: 0, kind: input, shape index: {}]
  %s1 = inlined_call_operand.vmem [shape: f32[32,4], index: 1, kind: input, shape index: {}]
  %s2 = inlined_call_operand.vmem [shape: f32[32,1], index: 2, kind: input, shape index: {}]
  %s3 = inlined_call_operand.vmem [shape: f32[16,32], index: 3, kind: input, shape index: {}]
  %s4 = inlined_call_operand.vmem [shape: f32[16,1], index: 4, kind: input, shape index: {}]
  %s5 = inlined_call_operand.vmem [shape: f32[1,16], index: 5, kind: input, shape index: {}]
  %s6 = inlined_call_operand.<no memory space> [shape: f32[1,1], index: 6, kind: input, shape index: {}]
  %s7 = inlined_call_operand.hbm [shape: f32[1,8], index: 7, kind: output, shape index: {}]
  %s8 = sld [smem:[#allocation0]]
  $region38: #{tpu_custom_call.1} parent=0
    _
  %s10 = ssub.s32 1, %s8
  %s11 = scalar_select 0, %s10, %s8
  %v12 = vstv %s6
  %13 = vst [vmem:[#allocation2] sm:$0x1] %v12
  $region1: #{tpu_custom_call.1} parent=0
    #allocation3 [shape = 'u8[512]{0}', space=vmem, size = 0x400, scoped, tag = 'output window, operand 0, single buffered']
    #allocation4 [shape = 's32[1]{0}', space=sflag, size = 0x4, scoped, tag = 'scoped memory for tpu_custom_call.1']
    %14 = vsyncpa [#allocation4], 0
    // Predicated region
    $region2: #{tpu_custom_call.1} parent=1 // pred_check
      _
    $region3: #{tpu_custom_call.1} parent=1 // pred_check_branch
      %16 = sbr.rel (0) target = $region5
    $region4: #{tpu_custom_call.1} parent=1 // pred_region
      _
    $region5: #{tpu_custom_call.1} parent=1 // pred_fallthru
      _
    // Predicated region
    $region6: #{tpu_custom_call.1} parent=1 // pred_check
      _
    $region7: #{tpu_custom_call.1} parent=1 // pred_check_branch
      %18 = sbr.rel (0) target = $region9
    $region8: #{tpu_custom_call.1} parent=1 // pred_region
      _
    $region9: #{tpu_custom_call.1} parent=1 // pred_fallthru
      _
    // Predicated region
    $region10: #{tpu_custom_call.1} parent=1 // pred_check
      _
    $region11: #{tpu_custom_call.1} parent=1 // pred_check_branch
      %20 = sbr.rel (0) target = $region13
    $region12: #{tpu_custom_call.1} parent=1 // pred_region
      _
    $region13: #{tpu_custom_call.1} parent=1 // pred_fallthru
      _
    // Predicated region
    $region14: #{tpu_custom_call.1} parent=1 // pred_check
      _
    $region15: #{tpu_custom_call.1} parent=1 // pred_check_branch
      %22 = sbr.rel (0) target = $region17
    $region16: #{tpu_custom_call.1} parent=1 // pred_region
      _
    $region17: #{tpu_custom_call.1} parent=1 // pred_fallthru
      _
    // Predicated region
    $region18: #{tpu_custom_call.1} parent=1 // pred_check
      _
    $region19: #{tpu_custom_call.1} parent=1 // pred_check_branch
      %24 = sbr.rel (0) target = $region21
    $region20: #{tpu_custom_call.1} parent=1 // pred_region
      _
    $region21: #{tpu_custom_call.1} parent=1 // pred_fallthru
      _
    // Predicated region
    $region22: #{tpu_custom_call.1} parent=1 // pred_check
      _
    $region23: #{tpu_custom_call.1} parent=1 // pred_check_branch
      %26 = sbr.rel (0) target = $region25
    $region24: #{tpu_custom_call.1} parent=1 // pred_region
      _
    $region25: #{tpu_custom_call.1} parent=1 // pred_fallthru
      _
    // Predicated region
    $region26: #{tpu_custom_call.1} parent=1 // pred_check
      _
    $region27: #{tpu_custom_call.1} parent=1 // pred_check_branch
      %28 = sbr.rel (0) target = $region29
    $region28: #{tpu_custom_call.1} parent=1 // pred_region
      _
    $region29: #{tpu_custom_call.1} parent=1 // pred_fallthru
      _
    %v29 = vld [vmem:[%s1] sm:$0xff]
    %v30 = vld [vmem:[%s1 + $0x8] sm:$0xff]
    %v31 = vld [vmem:[%s1 + $0x10] sm:$0xff]
    %v32 = vld [vmem:[%s1 + $0x18] sm:$0xff]
    %v33 = vld [vmem:[%s2] sm:$0xff]
    %v34 = vld [vmem:[%s2 + $0x8] sm:$0xff]
    %v35 = vld [vmem:[%s2 + $0x10] sm:$0xff]
    %v36 = vld [vmem:[%s2 + $0x18] sm:$0xff]
    %v37 = vld [vmem:[%s0] sm:$0xff]
    %39 = vset.pattern.permute.xlu0 0
    %40 = vperm.xlu0 %39, %v33
    %v41 = vpop.permute.xlu0 %40
    %44 = vset.pattern.permute.xlu0 0
    %45 = vperm.xlu0 %44, %v34
    %v46 = vpop.permute.xlu0 %45
    %49 = vset.pattern.permute.xlu0 0
    %50 = vperm.xlu0 %49, %v35
    %v51 = vpop.permute.xlu0 %50
    %54 = vset.pattern.permute.xlu0 0
    %55 = vperm.xlu0 %54, %v36
    %v56 = vpop.permute.xlu0 %55
    %vm58 = vcmask 31744
    %v60 = vsel %vm58, %v29, 0
    %v63 = vsel %vm58, %v30, 0
    %v66 = vsel %vm58, %v31, 0
    %v69 = vsel %vm58, %v32, 0
    %v72 = vsel %vm58, %v37, 0
    %74 = vmatprep.subr.mxu0 0.0
    %75 = vmatpush1.xpose.msra.mxu0 0.0
    %76 = vmatprep.subr.mxu0 0.0
    %77 = vmatpush1.xpose.msra.mxu0 0.0
    %78 = vmatprep.subr.mxu0 0.0
    %79 = vmatpush1.xpose.msra.mxu0 0.0
    %80 = vmatprep.subr.mxu0 0.0
    %81 = vmatpush1.xpose.msra.mxu0 0.0
    %82 = vmatprep.subr.mxu0 0.0
    %83 = vmatpush1.xpose.msra.mxu0 0.0
    %84 = vmatprep.subr.mxu0 0.0
    %85 = vmatpush1.xpose.msra.mxu0 0.0
    %86 = vmatprep.subr.mxu0 0.0
    %87 = vmatpush1.xpose.msra.mxu0 0.0
    %88 = vmatprep.subr.mxu0 0.0
    %89 = vmatpush1.xpose.msra.mxu0 0.0
    %90 = vmatprep.subr.mxu0 0.0
    %91 = vmatpush1.xpose.msra.mxu0 0.0
    %92 = vmatprep.subr.mxu0 0.0
    %93 = vmatpush1.xpose.msra.mxu0 0.0
    %94 = vmatprep.subr.mxu0 0.0
    %95 = vmatpush1.xpose.msra.mxu0 0.0
    %96 = vmatprep.subr.mxu0 0.0
    %97 = vmatpush1.xpose.msra.mxu0 0.0
    %98 = vmatprep.subr.mxu0 0.0
    %99 = vmatpush1.xpose.msra.mxu0 0.0
    %100 = vmatprep.subr.mxu0 0.0
    %101 = vmatpush1.xpose.msra.mxu0 0.0
    %102 = vmatprep.subr.mxu0 0.0
    %103 = vmatpush1.xpose.msra.mxu0 0.0
    %104 = vmatprep.subr.mxu0 0.0
    %105 = vmatpush1.xpose.msra.mxu0 %v72
    %106 = vmatprep.subr.mxu0 0.0
    %107 = vmatpush2.xpose.msra.mxu0 0.0
    %108 = vmatprep.subr.mxu0 0.0
    %109 = vmatpush2.xpose.msra.mxu0 0.0
    %110 = vmatprep.subr.mxu0 0.0
    %111 = vmatpush2.xpose.msra.mxu0 0.0
    %112 = vmatprep.subr.mxu0 0.0
    %113 = vmatpush2.xpose.msra.mxu0 0.0
    %114 = vmatprep.subr.mxu0 0.0
    %115 = vmatpush2.xpose.msra.mxu0 0.0
    %116 = vmatprep.subr.mxu0 0.0
    %117 = vmatpush2.xpose.msra.mxu0 0.0
    %118 = vmatprep.subr.mxu0 0.0
    %119 = vmatpush2.xpose.msra.mxu0 0.0
    %120 = vmatprep.subr.mxu0 0.0
    %121 = vmatpush2.xpose.msra.mxu0 0.0
    %122 = vmatprep.subr.mxu0 0.0
    %123 = vmatpush2.xpose.msra.mxu0 0.0
    %124 = vmatprep.subr.mxu0 0.0
    %125 = vmatpush2.xpose.msra.mxu0 0.0
    %126 = vmatprep.subr.mxu0 0.0
    %127 = vmatpush2.xpose.msra.mxu0 0.0
    %128 = vmatprep.subr.mxu0 0.0
    %129 = vmatpush2.xpose.msra.mxu0 0.0
    %130 = vmatprep.subr.mxu0 0.0
    %131 = vmatpush2.xpose.msra.mxu0 0.0
    %132 = vmatprep.subr.mxu0 0.0
    %133 = vmatpush2.xpose.msra.mxu0 0.0
    %134 = vmatprep.subr.mxu0 0.0
    %135 = vmatpush2.xpose.msra.mxu0 0.0
    %136 = vmatprep.subr.mxu0 0.0
    %137 = vmatpush2.xpose.msra.mxu0 0.0
    %138 = vmatprep.mubr.f32.mxu0 0.0
    %139 = vmatmul.mubr.f32.gmra.mxu0 %v60
    %v140 = vpop.f32.mrf.mxu0
    %v141 = vadd.f32 %v41, %v140
    %v142 = vpop.f32.mrf.mxu0
    %143 = vmatprep.mubr.f32.mxu0 0.0
    %144 = vmatmul.mubr.f32.gmra.mxu0 %v63
    %v145 = vpop.f32.mrf.mxu0
    %v146 = vadd.f32 %v46, %v145
    %v147 = vpop.f32.mrf.mxu0
    %148 = vmatprep.mubr.f32.mxu0 0.0
    %149 = vmatmul.mubr.f32.gmra.mxu0 %v66
    %v150 = vpop.f32.mrf.mxu0
    %v151 = vadd.f32 %v51, %v150
    %v152 = vpop.f32.mrf.mxu0
    %153 = vmatprep.mubr.f32.mxu0 0.0
    %154 = vmatmul.mubr.f32.gmra.mxu0 %v69
    %v155 = vpop.f32.mrf.mxu0
    %v156 = vadd.f32 %v56, %v155
    %v157 = vpop.f32.mrf.mxu0
    %158 = vdwg.mxu0
    %v159 = vmax.f32 %v141, 0.0
    %v160 = vmax.f32 %v146, 0.0
    %v161 = vmax.f32 %v151, 0.0
    %v162 = vmax.f32 %v156, 0.0
    %v163 = vld [vmem:[%s3] sm:$0xff]
    %v164 = vld [vmem:[%s3 + $0x8] sm:$0xff]
    %v165 = vld [vmem:[%s4] sm:$0xff]
    %v166 = vld [vmem:[%s4 + $0x8] sm:$0xff]
    %168 = vset.pattern.permute.xlu0 0
    %169 = vperm.xlu0 %168, %v165
    %v170 = vpop.permute.xlu0 %169
    %173 = vset.pattern.permute.xlu0 0
    %174 = vperm.xlu0 %173, %v166
    %v175 = vpop.permute.xlu0 %174
    %vm177 = vcmask 261120
    %v179 = vsel %vm177, %v163, 0
    %v182 = vsel %vm177, %v164, 0
    %184 = vmatprep.subr.mxu0 0.0
    %185 = vmatpush1.msra.mxu0 0.0
    %186 = vmatprep.subr.mxu0 0.0
    %187 = vmatpush1.msra.mxu0 0.0
    %188 = vmatprep.subr.mxu0 0.0
    %189 = vmatpush1.msra.mxu0 0.0
    %190 = vmatprep.subr.mxu0 0.0
    %191 = vmatpush1.msra.mxu0 0.0
    %192 = vmatprep.subr.mxu0 0.0
    %193 = vmatpush1.msra.mxu0 0.0
    %194 = vmatprep.subr.mxu0 0.0
    %195 = vmatpush1.msra.mxu0 0.0
    %196 = vmatprep.subr.mxu0 0.0
    %197 = vmatpush1.msra.mxu0 0.0
    %198 = vmatprep.subr.mxu0 0.0
    %199 = vmatpush1.msra.mxu0 0.0
    %200 = vmatprep.subr.mxu0 0.0
    %201 = vmatpush1.msra.mxu0 0.0
    %202 = vmatprep.subr.mxu0 0.0
    %203 = vmatpush1.msra.mxu0 0.0
    %204 = vmatprep.subr.mxu0 0.0
    %205 = vmatpush1.msra.mxu0 0.0
    %206 = vmatprep.subr.mxu0 0.0
    %207 = vmatpush1.msra.mxu0 0.0
    %208 = vmatprep.subr.mxu0 0.0
    %209 = vmatpush1.msra.mxu0 %v162
    %210 = vmatprep.subr.mxu0 0.0
    %211 = vmatpush1.msra.mxu0 %v161
    %212 = vmatprep.subr.mxu0 0.0
    %213 = vmatpush1.msra.mxu0 %v160
    %214 = vmatprep.subr.mxu0 0.0
    %215 = vmatpush1.msra.mxu0 %v159
    %216 = vmatprep.subr.mxu0 0.0
    %217 = vmatpush2.msra.mxu0 0.0
    %218 = vmatprep.subr.mxu0 0.0
    %219 = vmatpush2.msra.mxu0 0.0
    %220 = vmatprep.subr.mxu0 0.0
    %221 = vmatpush2.msra.mxu0 0.0
    %222 = vmatprep.subr.mxu0 0.0
    %223 = vmatpush2.msra.mxu0 0.0
    %224 = vmatprep.subr.mxu0 0.0
    %225 = vmatpush2.msra.mxu0 0.0
    %226 = vmatprep.subr.mxu0 0.0
    %227 = vmatpush2.msra.mxu0 0.0
    %228 = vmatprep.subr.mxu0 0.0
    %229 = vmatpush2.msra.mxu0 0.0
    %230 = vmatprep.subr.mxu0 0.0
    %231 = vmatpush2.msra.mxu0 0.0
    %232 = vmatprep.subr.mxu0 0.0
    %233 = vmatpush2.msra.mxu0 0.0
    %234 = vmatprep.subr.mxu0 0.0
    %235 = vmatpush2.msra.mxu0 0.0
    %236 = vmatprep.subr.mxu0 0.0
    %237 = vmatpush2.msra.mxu0 0.0
    %238 = vmatprep.subr.mxu0 0.0
    %239 = vmatpush2.msra.mxu0 0.0
    %240 = vmatprep.subr.mxu0 0.0
    %241 = vmatpush2.msra.mxu0 0.0
    %242 = vmatprep.subr.mxu0 0.0
    %243 = vmatpush2.msra.mxu0 0.0
    %244 = vmatprep.subr.mxu0 0.0
    %245 = vmatpush2.msra.mxu0 0.0
    %246 = vmatprep.subr.mxu0 0.0
    %247 = vmatpush2.msra.mxu0 0.0
    %248 = vmatprep.mubr.f32.mxu0 0.0
    %249 = vmatmul.mubr.f32.gmra.mxu0 %v179
    %v250 = vpop.f32.mrf.mxu0
    %v251 = vadd.f32 %v170, %v250
    %v252 = vpop.f32.mrf.mxu0
    %253 = vmatprep.mubr.f32.mxu0 0.0
    %254 = vmatmul.mubr.f32.gmra.mxu0 %v182
    %v255 = vpop.f32.mrf.mxu0
    %v256 = vadd.f32 %v175, %v255
    %v257 = vpop.f32.mrf.mxu0
    %258 = vdwg.mxu0
    %v259 = vmax.f32 %v251, 0.0
    %v260 = vmax.f32 %v256, 0.0
    %v261 = vld [vmem:[%s5] sm:$0x1]
    %v262 = vld [vmem:[#allocation2] sm:$0x1]
    %264 = vset.pattern.permute.xlu0 0
    %265 = vperm.xlu0 %264, %v262
    %v266 = vpop.permute.xlu0 %265
    %v268 = vlaneseq
    %v269 = vshrl.u32 %v268, 7
    %v270 = vsub.s32 0, %v269
    %v271 = vrot.slane %v266, %v270
    %vm272 = vcmask 130048
    %v274 = vsel %vm272, %v261, 0
    %276 = vmatprep.subr.mxu0 0.0
    %277 = vmatpush1.msra.mxu0 0.0
    %278 = vmatprep.subr.mxu0 0.0
    %279 = vmatpush1.msra.mxu0 0.0
    %280 = vmatprep.subr.mxu0 0.0
    %281 = vmatpush1.msra.mxu0 0.0
    %282 = vmatprep.subr.mxu0 0.0
    %283 = vmatpush1.msra.mxu0 0.0
    %284 = vmatprep.subr.mxu0 0.0
    %285 = vmatpush1.msra.mxu0 0.0
    %286 = vmatprep.subr.mxu0 0.0
    %287 = vmatpush1.msra.mxu0 0.0
    %288 = vmatprep.subr.mxu0 0.0
    %289 = vmatpush1.msra.mxu0 0.0
    %290 = vmatprep.subr.mxu0 0.0
    %291 = vmatpush1.msra.mxu0 0.0
    %292 = vmatprep.subr.mxu0 0.0
    %293 = vmatpush1.msra.mxu0 0.0
    %294 = vmatprep.subr.mxu0 0.0
    %295 = vmatpush1.msra.mxu0 0.0
    %296 = vmatprep.subr.mxu0 0.0
    %297 = vmatpush1.msra.mxu0 0.0
    %298 = vmatprep.subr.mxu0 0.0
    %299 = vmatpush1.msra.mxu0 0.0
    %300 = vmatprep.subr.mxu0 0.0
    %301 = vmatpush1.msra.mxu0 0.0
    %302 = vmatprep.subr.mxu0 0.0
    %303 = vmatpush1.msra.mxu0 0.0
    %304 = vmatprep.subr.mxu0 0.0
    %305 = vmatpush1.msra.mxu0 %v260
    %306 = vmatprep.subr.mxu0 0.0
    %307 = vmatpush1.msra.mxu0 %v259
    %308 = vmatprep.subr.mxu0 0.0
    %309 = vmatpush2.msra.mxu0 0.0
    %310 = vmatprep.subr.mxu0 0.0
    %311 = vmatpush2.msra.mxu0 0.0
    %312 = vmatprep.subr.mxu0 0.0
    %313 = vmatpush2.msra.mxu0 0.0
    %314 = vmatprep.subr.mxu0 0.0
    %315 = vmatpush2.msra.mxu0 0.0
    %316 = vmatprep.subr.mxu0 0.0
    %317 = vmatpush2.msra.mxu0 0.0
    %318 = vmatprep.subr.mxu0 0.0
    %319 = vmatpush2.msra.mxu0 0.0
    %320 = vmatprep.subr.mxu0 0.0
    %321 = vmatpush2.msra.mxu0 0.0
    %322 = vmatprep.subr.mxu0 0.0
    %323 = vmatpush2.msra.mxu0 0.0
    %324 = vmatprep.subr.mxu0 0.0
    %325 = vmatpush2.msra.mxu0 0.0
    %326 = vmatprep.subr.mxu0 0.0
    %327 = vmatpush2.msra.mxu0 0.0
    %328 = vmatprep.subr.mxu0 0.0
    %329 = vmatpush2.msra.mxu0 0.0
    %330 = vmatprep.subr.mxu0 0.0
    %331 = vmatpush2.msra.mxu0 0.0
    %332 = vmatprep.subr.mxu0 0.0
    %333 = vmatpush2.msra.mxu0 0.0
    %334 = vmatprep.subr.mxu0 0.0
    %335 = vmatpush2.msra.mxu0 0.0
    %336 = vmatprep.subr.mxu0 0.0
    %337 = vmatpush2.msra.mxu0 0.0
    %338 = vmatprep.subr.mxu0 0.0
    %339 = vmatpush2.msra.mxu0 0.0
    %340 = vmatprep.mubr.f32.mxu0 0.0
    %341 = vmatmul.mubr.f32.gmra.mxu0 %v274
    %v342 = vpop.f32.mrf.mxu0
    %v343 = vadd.f32 %v271, %v342
    %v344 = vpop.f32.mrf.mxu0
    %345 = vdwg.mxu0
    %vm346 = vcmask 57344
    %347 = vst.msk [vmem:[#allocation3] sm:$0x1] %vm346, %v343
    // Predicated region
    $region30: #{tpu_custom_call.1} parent=1 // pred_check
      _
    $region31: #{tpu_custom_call.1} parent=1 // pred_check_branch
      %349 = sbr.rel (0) target = $region33
    $region32: #{tpu_custom_call.1} parent=1 // pred_region
      %s351 = ssub.s32 16, 16
      %352 = vsyncadd [#allocation4], %s351
      %s354 = sshll.u32 [#allocation3], 4
      %s355 = int_to_ptr.vmem [resolvable:$true] %s354
      %357 = dma.vmem_to_hbm [thread:$0]  %s355, 16, %s7, [#allocation4]
    $region33: #{tpu_custom_call.1} parent=1 // pred_fallthru
      _
    // Predicated region
    $region34: #{tpu_custom_call.1} parent=1 // pred_check
      _
    $region35: #{tpu_custom_call.1} parent=1 // pred_check_branch
      %359 = sbr.rel (0) target = $region37
    $region36: #{tpu_custom_call.1} parent=1 // pred_region
      %360 = dma.done [#allocation4], 16
    $region37: #{tpu_custom_call.1} parent=1 // pred_fallthru
      _
    %361 = vsyncpa [#allocation4], 1

</llo_original>
